<compile_context>
chip_gen: v5e
topology: v5e:2x2
jax: 0.10.0
libtpu: 0.0.40
codegen_flags: <defaults>
</compile_context>

<pallas_src>
import jax
import jax.numpy as jnp
from jax.experimental import pallas as pl
from jax.experimental.pallas import tpu as pltpu

N_INPUTS = 2          # MountainCar-v0 observation_space.shape[0]
HIDDEN = 120          # hidden_layer
HIDDEN2 = HIDDEN // 2  # 60
N_OUTPUTS = 3         # MountainCar-v0 action_space.n

LANE = 128            # lane-dense padded feature width


def _round_up(x, m):
    return ((x + m - 1) // m) * m


def _mlp_kernel(x_ref, w1_ref, b1_ref, w2_ref, b2_ref, w3_ref, b3_ref, o_ref):
    x = x_ref[...]  # (bt, 2) f32

    # ---- Layer 1 (K=2): VPU broadcast-FMA, no MXU pass needed ----
    # (bt,1)*(1,128) + (bt,1)*(1,128) + (1,128) -> (bt,128)
    a1 = (x[:, 0:1] * w1_ref[0:1, :]
          + x[:, 1:2] * w1_ref[1:2, :]
          + b1_ref[...])
    a1 = jnp.maximum(a1, 0.0)

    # ---- Layer 2: bf16 x bf16 -> f32 accumulate on the MXU ----
    a2 = jnp.dot(a1.astype(jnp.bfloat16), w2_ref[...],
                 preferred_element_type=jnp.float32)
    a2 = jnp.maximum(a2 + b2_ref[...], 0.0)

    # ---- Layer 3: bf16 x bf16 -> f32 accumulate ----
    out = jnp.dot(a2.astype(jnp.bfloat16), w3_ref[...],
                  preferred_element_type=jnp.float32)
    o_ref[...] = (out + b3_ref[...]).astype(o_ref.dtype)


def prepare_params(params):
    """Zero-pad params to lane-dense shapes (done once, outside the kernel) and
    cast the MXU-side weights to bf16. Padded rows/cols are zero so padded
    output lanes stay exactly zero before the wrapper slice."""
    w1, b1, w2, b2, w3, b3 = params

    def pad2(a, rows, cols, dtype):
        buf = jnp.zeros((rows, cols), dtype)
        return buf.at[: a.shape[0], : a.shape[1]].set(a.astype(dtype))

    w1p = pad2(w1, N_INPUTS, LANE, jnp.float32)   # (2, 128)
    b1p = pad2(b1, 1, LANE, jnp.float32)          # (1, 128)
    w2p = pad2(w2, LANE, LANE, jnp.bfloat16)      # (128, 128)
    b2p = pad2(b2, 1, LANE, jnp.float32)          # (1, 128)
    w3p = pad2(w3, LANE, LANE, jnp.bfloat16)      # (128, 128)
    b3p = pad2(b3, 1, LANE, jnp.float32)          # (1, 128)
    return (w1p, b1p, w2p, b2p, w3p, b3p)


def neural_network_forward(x, padded_params, *, batch_tile=256):
    """Pallas forward pass.
    x: (B, N_INPUTS) float32; padded_params from prepare_params().
    Returns (B, N_OUTPUTS) float32."""
    w1p, b1p, w2p, b2p, w3p, b3p = padded_params
    B = x.shape[0]
    x = x.astype(jnp.float32)

    # Batch tile: multiple of 8, capped at batch_tile; pad batch to a multiple.
    bt = min(batch_tile, _round_up(B, 8))
    Bp = _round_up(B, bt)
    if Bp != B:
        x = jnp.pad(x, ((0, Bp - B), (0, 0)))

    grid = (Bp // bt,)

    flops = 2 * Bp * (N_INPUTS * HIDDEN + HIDDEN * HIDDEN2 + HIDDEN2 * N_OUTPUTS)
    bytes_accessed = (
        Bp * N_INPUTS * 4
        + sum(int(p.size) * p.dtype.itemsize for p in padded_params)
        + Bp * LANE * 4
    )
    cost = pl.CostEstimate(flops=flops, transcendentals=0,
                           bytes_accessed=bytes_accessed)

    def weight_spec(a):
        return pl.BlockSpec(a.shape, lambda i: (0, 0))

    out = pl.pallas_call(
        _mlp_kernel,
        out_shape=jax.ShapeDtypeStruct((Bp, LANE), jnp.float32),
        grid=grid,
        in_specs=[
            pl.BlockSpec((bt, N_INPUTS), lambda i: (i, 0)),   # x tile
            weight_spec(w1p), weight_spec(b1p),
            weight_spec(w2p), weight_spec(b2p),
            weight_spec(w3p), weight_spec(b3p),
        ],
        out_specs=pl.BlockSpec((bt, LANE), lambda i: (i, 0)),
        compiler_params=pltpu.CompilerParams(
            dimension_semantics=("parallel",)),
        cost_estimate=cost,
    )(x, w1p, b1p, w2p, b2p, w3p, b3p)

    # Slice the lane-dense slab back to the real (B, 3) output.
    return out[:B, :N_OUTPUTS]


def init_params(key):
    """Deterministic init mimicking PyTorch nn.Linear
    (uniform(-1/sqrt(fan_in), 1/sqrt(fan_in))). Weights stored as
    (in_features, out_features)."""
    def linear(k, fan_in, fan_out):
        kw, kb = jax.random.split(k)
        bound = 1.0 / (fan_in ** 0.5)
        w = jax.random.uniform(kw, (fan_in, fan_out), jnp.float32, -bound, bound)
        b = jax.random.uniform(kb, (1, fan_out), jnp.float32, -bound, bound)
        return w, b

    k1, k2, k3 = jax.random.split(key, 3)
    w1, b1 = linear(k1, N_INPUTS, HIDDEN)
    w2, b2 = linear(k2, HIDDEN, HIDDEN2)
    w3, b3 = linear(k3, HIDDEN2, N_OUTPUTS)
    return (w1, b1, w2, b2, w3, b3)


def reference_forward(x, params):
    """Plain-JAX f32 reference for correctness checking."""
    w1, b1, w2, b2, w3, b3 = params
    a1 = jnp.maximum(x @ w1 + b1, 0.0)
    a2 = jnp.maximum(a1 @ w2 + b2, 0.0)
    return a2 @ w3 + b3


if __name__ == "__main__":
    key = jax.random.PRNGKey(0)
    k_params, k_x = jax.random.split(key)

    params = init_params(k_params)
    padded = prepare_params(params)   # pad/cast ONCE; reuse across calls

    # Small batch of MountainCar-like observations: (B, 2)
    B = 8
    x = jax.random.normal(k_x, (B, N_INPUTS), jnp.float32)

    out = neural_network_forward(x, padded)
    out = jax.block_until_ready(out)

    ref = reference_forward(x, params)
    assert out.shape == (B, N_OUTPUTS)
    # bf16 MXU inputs (f32 accumulate) -> small, DQN-tolerable numeric delta.
    assert jnp.allclose(out, ref, atol=3e-2, rtol=3e-2), "mismatch vs reference"

    print("KERNEL_OK")
</pallas_src>

<mosaic_0001>
module attributes {stable_mosaic.version = 11 : i64} {
  func.func @_mlp_kernel(%arg0: i32, %arg1: memref<8x2xf32, #tpu.memory_space<vmem>>, %arg2: memref<2x128xf32, #tpu.memory_space<vmem>>, %arg3: memref<1x128xf32, #tpu.memory_space<vmem>>, %arg4: memref<128x128xbf16, #tpu.memory_space<vmem>>, %arg5: memref<1x128xf32, #tpu.memory_space<vmem>>, %arg6: memref<128x128xbf16, #tpu.memory_space<vmem>>, %arg7: memref<1x128xf32, #tpu.memory_space<vmem>>, %arg8: memref<8x128xf32, #tpu.memory_space<vmem>>) attributes {dimension_semantics = [#tpu.dimension_semantics<parallel>], iteration_bounds = array<i64: 1>, scalar_prefetch = 0 : i64, scratch_operands = 0 : i64, tpu.core_type = #tpu.core_type<tc>, window_params = [{transform_indices = @transform_0, window_bounds = array<i64: 8, 2>}, {pipeline_mode = #tpu.pipeline_mode<synchronous>, transform_indices = @transform_1, window_bounds = array<i64: 2, 128>}, {pipeline_mode = #tpu.pipeline_mode<synchronous>, transform_indices = @transform_2, window_bounds = array<i64: 1, 128>}, {pipeline_mode = #tpu.pipeline_mode<synchronous>, transform_indices = @transform_3, window_bounds = array<i64: 128, 128>}, {pipeline_mode = #tpu.pipeline_mode<synchronous>, transform_indices = @transform_4, window_bounds = array<i64: 1, 128>}, {pipeline_mode = #tpu.pipeline_mode<synchronous>, transform_indices = @transform_5, window_bounds = array<i64: 128, 128>}, {pipeline_mode = #tpu.pipeline_mode<synchronous>, transform_indices = @transform_6, window_bounds = array<i64: 1, 128>}, {transform_indices = @transform_7, window_bounds = array<i64: 8, 128>}]} {
    %c0 = arith.constant 0 : index
    %c0_0 = arith.constant 0 : index
    %0 = vector.load %arg1[%c0, %c0_0] : memref<8x2xf32, #tpu.memory_space<vmem>>, vector<8x2xf32>
    %1 = vector.extract_strided_slice %0 {offsets = [0, 0], sizes = [8, 1], strides = [1, 1]} : vector<8x2xf32> to vector<8x1xf32>
    %c0_1 = arith.constant 0 : index
    %c0_2 = arith.constant 0 : index
    %2 = vector.load %arg2[%c0_1, %c0_2] : memref<2x128xf32, #tpu.memory_space<vmem>>, vector<1x128xf32>
    %3 = vector.broadcast %1 : vector<8x1xf32> to vector<8x128xf32>
    %4 = vector.broadcast %2 : vector<1x128xf32> to vector<8x128xf32>
    %5 = arith.mulf %3, %4 : vector<8x128xf32>
    %6 = vector.extract_strided_slice %0 {offsets = [0, 1], sizes = [8, 1], strides = [1, 1]} : vector<8x2xf32> to vector<8x1xf32>
    %c1 = arith.constant 1 : index
    %c0_3 = arith.constant 0 : index
    %7 = vector.load %arg2[%c1, %c0_3] : memref<2x128xf32, #tpu.memory_space<vmem>>, vector<1x128xf32>
    %8 = vector.broadcast %6 : vector<8x1xf32> to vector<8x128xf32>
    %9 = vector.broadcast %7 : vector<1x128xf32> to vector<8x128xf32>
    %10 = arith.mulf %8, %9 : vector<8x128xf32>
    %11 = arith.addf %5, %10 : vector<8x128xf32>
    %c0_4 = arith.constant 0 : index
    %c0_5 = arith.constant 0 : index
    %12 = vector.load %arg3[%c0_4, %c0_5] : memref<1x128xf32, #tpu.memory_space<vmem>>, vector<1x128xf32>
    %13 = vector.broadcast %12 : vector<1x128xf32> to vector<8x128xf32>
    %14 = arith.addf %11, %13 : vector<8x128xf32>
    %cst = arith.constant 0.000000e+00 : f32
    %15 = vector.broadcast %cst : f32 to vector<8x128xf32>
    %16 = arith.maximumf %14, %15 : vector<8x128xf32>
    %17 = arith.truncf %16 : vector<8x128xf32> to vector<8x128xbf16>
    %c0_6 = arith.constant 0 : index
    %c0_7 = arith.constant 0 : index
    %18 = vector.load %arg4[%c0_6, %c0_7] : memref<128x128xbf16, #tpu.memory_space<vmem>>, vector<128x128xbf16>
    %cst_8 = arith.constant dense<0.000000e+00> : vector<8x128xf32>
    %19 = tpu.matmul %17, %18, %cst_8 {dimension_numbers = #tpu.dot_dimension_numbers<[1], [0], [0], [1], [0, 0, 1, 1], [], []>} : vector<8x128xbf16>, vector<128x128xbf16>, vector<8x128xf32> -> vector<8x128xf32>
    %c0_9 = arith.constant 0 : index
    %c0_10 = arith.constant 0 : index
    %20 = vector.load %arg5[%c0_9, %c0_10] : memref<1x128xf32, #tpu.memory_space<vmem>>, vector<1x128xf32>
    %21 = vector.broadcast %20 : vector<1x128xf32> to vector<8x128xf32>
    %22 = arith.addf %19, %21 : vector<8x128xf32>
    %cst_11 = arith.constant 0.000000e+00 : f32
    %23 = vector.broadcast %cst_11 : f32 to vector<8x128xf32>
    %24 = arith.maximumf %22, %23 : vector<8x128xf32>
    %25 = arith.truncf %24 : vector<8x128xf32> to vector<8x128xbf16>
    %c0_12 = arith.constant 0 : index
    %c0_13 = arith.constant 0 : index
    %26 = vector.load %arg6[%c0_12, %c0_13] : memref<128x128xbf16, #tpu.memory_space<vmem>>, vector<128x128xbf16>
    %cst_14 = arith.constant dense<0.000000e+00> : vector<8x128xf32>
    %27 = tpu.matmul %25, %26, %cst_14 {dimension_numbers = #tpu.dot_dimension_numbers<[1], [0], [0], [1], [0, 0, 1, 1], [], []>} : vector<8x128xbf16>, vector<128x128xbf16>, vector<8x128xf32> -> vector<8x128xf32>
    %c0_15 = arith.constant 0 : index
    %c0_16 = arith.constant 0 : index
    %28 = vector.load %arg7[%c0_15, %c0_16] : memref<1x128xf32, #tpu.memory_space<vmem>>, vector<1x128xf32>
    %29 = vector.broadcast %28 : vector<1x128xf32> to vector<8x128xf32>
    %30 = arith.addf %27, %29 : vector<8x128xf32>
    %c0_17 = arith.constant 0 : index
    %c0_18 = arith.constant 0 : index
    %31 = vector.load %arg8[%c0_17, %c0_18] : memref<8x128xf32, #tpu.memory_space<vmem>>, vector<8x128xf32>
    tpu.vector_store %arg8[%c0_17, %c0_18], %30 {strides = array<i32>} : memref<8x128xf32, #tpu.memory_space<vmem>>, vector<8x128xf32>,
    return
  }
  func.func @transform_0(%arg0: i32) -> (i32, i32) {
    %c0_i32 = arith.constant 0 : i32
    %c0_i32_0 = arith.constant 0 : i32
    return %arg0, %c0_i32 : i32, i32
  }
  func.func @transform_1(%arg0: i32) -> (i32, i32) {
    %c0_i32 = arith.constant 0 : i32
    %c0_i32_0 = arith.constant 0 : i32
    %c0_i32_1 = arith.constant 0 : i32
    return %c0_i32, %c0_i32_0 : i32, i32
  }
  func.func @transform_2(%arg0: i32) -> (i32, i32) {
    %c0_i32 = arith.constant 0 : i32
    %c0_i32_0 = arith.constant 0 : i32
    %c0_i32_1 = arith.constant 0 : i32
    return %c0_i32, %c0_i32_0 : i32, i32
  }
  func.func @transform_3(%arg0: i32) -> (i32, i32) {
    %c0_i32 = arith.constant 0 : i32
    %c0_i32_0 = arith.constant 0 : i32
    %c0_i32_1 = arith.constant 0 : i32
    return %c0_i32, %c0_i32_0 : i32, i32
  }
  func.func @transform_4(%arg0: i32) -> (i32, i32) {
    %c0_i32 = arith.constant 0 : i32
    %c0_i32_0 = arith.constant 0 : i32
    %c0_i32_1 = arith.constant 0 : i32
    return %c0_i32, %c0_i32_0 : i32, i32
  }
  func.func @transform_5(%arg0: i32) -> (i32, i32) {
    %c0_i32 = arith.constant 0 : i32
    %c0_i32_0 = arith.constant 0 : i32
    %c0_i32_1 = arith.constant 0 : i32
    return %c0_i32, %c0_i32_0 : i32, i32
  }
  func.func @transform_6(%arg0: i32) -> (i32, i32) {
    %c0_i32 = arith.constant 0 : i32
    %c0_i32_0 = arith.constant 0 : i32
    %c0_i32_1 = arith.constant 0 : i32
    return %c0_i32, %c0_i32_0 : i32, i32
  }
  func.func @transform_7(%arg0: i32) -> (i32, i32) {
    %c0_i32 = arith.constant 0 : i32
    %c0_i32_0 = arith.constant 0 : i32
    return %arg0, %c0_i32 : i32, i32
  }
}

</mosaic_0001>

<llo_original>
// kernel: tpu_custom_call.1
$region0: #{tpu_custom_call.1}
  #allocation0 [shape = 'u32[]', space=smem, size = 0x4, offset = 0x4, fixed_abs, tag = 'smem constant byte address 0x4 - core index']
  #allocation1 [shape = 'u32[72,128]{1,0:T(1,128)}', space=vmem, size = 0x9000, scoped, tag = 'internal scratch']
  %s0 = inlined_call_operand.vmem [shape: f32[8,2], index: 0, kind: input, shape index: {}]
  %s1 = inlined_call_operand.vmem [shape: f32[2,128], index: 1, kind: input, shape index: {}]
  %s2 = inlined_call_operand.vmem [shape: f32[1,128], index: 2, kind: input, shape index: {}]
  %s3 = inlined_call_operand.hbm [shape: bf16[128,128], index: 3, kind: input, shape index: {}]
  %s4 = inlined_call_operand.vmem [shape: f32[1,128], index: 4, kind: input, shape index: {}]
  %s5 = inlined_call_operand.hbm [shape: bf16[128,128], index: 5, kind: input, shape index: {}]
  %s6 = inlined_call_operand.vmem [shape: f32[1,128], index: 6, kind: input, shape index: {}]
  %s7 = inlined_call_operand.hbm [shape: f32[8,128], index: 7, kind: output, shape index: {}]
  %s8 = sld [smem:[#allocation0]]
  $region46: #{tpu_custom_call.1} parent=0
    _
  %s10 = ssub.s32 1, %s8
  %s11 = scalar_select 0, %s10, %s8
  $region1: #{tpu_custom_call.1} parent=0
    #allocation2 [shape = 'u8[32768]{0}', space=vmem, size = 0x8000, scoped, tag = 'input window, operand 3, single buffered']
    #allocation3 [shape = 's32[1]{0}', space=sflag, size = 0x4, scoped, tag = 'scoped memory for tpu_custom_call.1']
    #allocation4 [shape = 's32[1]{0}', space=sflag, size = 0x4, scoped, tag = 'scoped memory for tpu_custom_call.1']
    #allocation5 [shape = 'u8[32768]{0}', space=vmem, size = 0x8000, scoped, tag = 'input window, operand 5, single buffered']
    #allocation6 [shape = 's32[1]{0}', space=sflag, size = 0x4, scoped, tag = 'scoped memory for tpu_custom_call.1']
    #allocation7 [shape = 'u8[4096]{0}', space=vmem, size = 0x1000, scoped, tag = 'output window, operand 0, single buffered']
    %12 = vsyncpa [#allocation3], 0
    %13 = vsyncpa [#allocation6], 0
    %14 = vsyncpa [#allocation4], 0
    // Predicated region
    $region2: #{tpu_custom_call.1} parent=1 // pred_check
      _
    $region3: #{tpu_custom_call.1} parent=1 // pred_check_branch
      %16 = sbr.rel (0) target = $region5
    $region4: #{tpu_custom_call.1} parent=1 // pred_region
      _
    $region5: #{tpu_custom_call.1} parent=1 // pred_fallthru
      _
    // Predicated region
    $region6: #{tpu_custom_call.1} parent=1 // pred_check
      _
    $region7: #{tpu_custom_call.1} parent=1 // pred_check_branch
      %18 = sbr.rel (0) target = $region9
    $region8: #{tpu_custom_call.1} parent=1 // pred_region
      _
    $region9: #{tpu_custom_call.1} parent=1 // pred_fallthru
      _
    // Predicated region
    $region10: #{tpu_custom_call.1} parent=1 // pred_check
      _
    $region11: #{tpu_custom_call.1} parent=1 // pred_check_branch
      %20 = sbr.rel (0) target = $region13
    $region12: #{tpu_custom_call.1} parent=1 // pred_region
      _
    $region13: #{tpu_custom_call.1} parent=1 // pred_fallthru
      _
    // Predicated region
    $region14: #{tpu_custom_call.1} parent=1 // pred_check
      _
    $region15: #{tpu_custom_call.1} parent=1 // pred_check_branch
      %22 = sbr.rel (0) target = $region17
    $region16: #{tpu_custom_call.1} parent=1 // pred_region
      %24 = vsyncadd [#allocation3], 0
      %s25 = sshll.u32 %s3, 4
      %s26 = int_to_ptr.hbm [resolvable:$true] %s25
      %s27 = sshll.u32 [#allocation2], 4
      %s28 = int_to_ptr.vmem [resolvable:$true] %s27
      %33 = dma.hbm_to_vmem [thread:$0]  %s26, 1024, %s28, [#allocation3], 64, 64, 4
    $region17: #{tpu_custom_call.1} parent=1 // pred_fallthru
      _
    // Predicated region
    $region18: #{tpu_custom_call.1} parent=1 // pred_check
      _
    $region19: #{tpu_custom_call.1} parent=1 // pred_check_branch
      %35 = sbr.rel (0) target = $region21
    $region20: #{tpu_custom_call.1} parent=1 // pred_region
      _
    $region21: #{tpu_custom_call.1} parent=1 // pred_fallthru
      _
    // Predicated region
    $region22: #{tpu_custom_call.1} parent=1 // pred_check
      _
    $region23: #{tpu_custom_call.1} parent=1 // pred_check_branch
      %37 = sbr.rel (0) target = $region25
    $region24: #{tpu_custom_call.1} parent=1 // pred_region
      %39 = vsyncadd [#allocation6], 0
      %s40 = sshll.u32 %s5, 4
      %s41 = int_to_ptr.hbm [resolvable:$true] %s40
      %s42 = sshll.u32 [#allocation5], 4
      %s43 = int_to_ptr.vmem [resolvable:$true] %s42
      %48 = dma.hbm_to_vmem [thread:$0]  %s41, 1024, %s43, [#allocation6], 64, 64, 4
    $region25: #{tpu_custom_call.1} parent=1 // pred_fallthru
      _
    // Predicated region
    $region26: #{tpu_custom_call.1} parent=1 // pred_check
      _
    $region27: #{tpu_custom_call.1} parent=1 // pred_check_branch
      %50 = sbr.rel (0) target = $region29
    $region28: #{tpu_custom_call.1} parent=1 // pred_region
      _
    $region29: #{tpu_custom_call.1} parent=1 // pred_fallthru
      _
    // Predicated region
    $region30: #{tpu_custom_call.1} parent=1 // pred_check
      _
    $region31: #{tpu_custom_call.1} parent=1 // pred_check_branch
      %52 = sbr.rel (0) target = $region33
    $region32: #{tpu_custom_call.1} parent=1 // pred_region
      %54 = dma.done [#allocation3], 1024
    $region33: #{tpu_custom_call.1} parent=1 // pred_fallthru
      _
    // Predicated region
    $region34: #{tpu_custom_call.1} parent=1 // pred_check
      _
    $region35: #{tpu_custom_call.1} parent=1 // pred_check_branch
      %56 = sbr.rel (0) target = $region37
    $region36: #{tpu_custom_call.1} parent=1 // pred_region
      %58 = dma.done [#allocation6], 1024
    $region37: #{tpu_custom_call.1} parent=1 // pred_fallthru
      _
    %v59 = vld [vmem:[%s0] sm:$0xff]
    %v60 = vld [vmem:[%s1] sm:$0x1]
    %62 = vset.pattern.permute.xlu0 0
    %63 = vperm.xlu0 %62, %v59
    %v64 = vpop.permute.xlu0 %63
    %v66 = vperm.slane %v60, 0
    %v67 = vmul.f32 %v64, %v66
    %v68 = vld [vmem:[%s1 + $0x1] sm:$0x1]
    %69 = vset.pattern.permute.xlu0 1
    %70 = vperm.xlu0 %69, %v59
    %v71 = vpop.permute.xlu0 %70
    %v73 = vperm.slane %v68, 0
    %v74 = vmul.f32 %v71, %v73
    %v75 = vadd.f32 %v67, %v74
    %v76 = vld [vmem:[%s2] sm:$0x1]
    %v78 = vperm.slane %v76, 0
    %v80 = vadd.f32 %v75, %v78
    %v81 = vmax.f32 %v80, 0.0
    %v82 = vpack.c.bf16 %v81, %v81
    %v83 = vld [vmem:[#allocation2] sm:$0xf]
    %v84 = vld [vmem:[#allocation2 + $0x4] sm:$0xf]
    %v85 = vld [vmem:[#allocation2 + $0x8] sm:$0xf]
    %v86 = vld [vmem:[#allocation2 + $0xc] sm:$0xf]
    %v87 = vld [vmem:[#allocation2 + $0x10] sm:$0xf]
    %v88 = vld [vmem:[#allocation2 + $0x14] sm:$0xf]
    %v89 = vld [vmem:[#allocation2 + $0x18] sm:$0xf]
    %v90 = vld [vmem:[#allocation2 + $0x1c] sm:$0xf]
    %v91 = vld [vmem:[#allocation2 + $0x20] sm:$0xf]
    %v92 = vld [vmem:[#allocation2 + $0x24] sm:$0xf]
    %v93 = vld [vmem:[#allocation2 + $0x28] sm:$0xf]
    %v94 = vld [vmem:[#allocation2 + $0x2c] sm:$0xf]
    %v95 = vld [vmem:[#allocation2 + $0x30] sm:$0xf]
    %v96 = vld [vmem:[#allocation2 + $0x34] sm:$0xf]
    %v97 = vld [vmem:[#allocation2 + $0x38] sm:$0xf]
    %v98 = vld [vmem:[#allocation2 + $0x3c] sm:$0xf]
    %v99 = vld [vmem:[%s4] sm:$0x1]
    %v101 = vperm.slane %v99, 0
    %v119 = vunpack.c.l.b16 %v83
    %v120 = vunpack.c.l.b16 %v84
    %v121 = vunpack.c.l.b16 %v85
    %v122 = vunpack.c.l.b16 %v86
    %v123 = vunpack.c.l.b16 %v87
    %v124 = vunpack.c.l.b16 %v88
    %v125 = vunpack.c.l.b16 %v89
    %v126 = vunpack.c.l.b16 %v90
    %v127 = vunpack.c.l.b16 %v91
    %v128 = vunpack.c.l.b16 %v92
    %v129 = vunpack.c.l.b16 %v93
    %v130 = vunpack.c.l.b16 %v94
    %v131 = vunpack.c.l.b16 %v95
    %v132 = vunpack.c.l.b16 %v96
    %v133 = vunpack.c.l.b16 %v97
    %v134 = vunpack.c.l.b16 %v98
    %v135 = vpack.c.b16 %v120, %v119
    %v136 = vpack.c.b16 %v122, %v121
    %v137 = vpack.c.b16 %v124, %v123
    %v138 = vpack.c.b16 %v126, %v125
    %v139 = vpack.c.b16 %v128, %v127
    %v140 = vpack.c.b16 %v130, %v129
    %v141 = vpack.c.b16 %v132, %v131
    %v142 = vpack.c.b16 %v134, %v133
    %151 = vmatpush.bf16.msra.mxu0 %v142
    %152 = vmatpush.bf16.msra.mxu0 %v141
    %153 = vmatpush.bf16.msra.mxu0 %v140
    %154 = vmatpush.bf16.msra.mxu0 %v139
    %155 = vmatpush.bf16.msra.mxu0 %v138
    %156 = vmatpush.bf16.msra.mxu0 %v137
    %157 = vmatpush.bf16.msra.mxu0 %v136
    %158 = vmatpush.bf16.msra.mxu0 %v135
    %159 = vmatmul.bf16.gmra.mxu0 %v82
    %v160 = vpop.f32.mrf.mxu0
    %v161 = vadd.f32 %v101, %v160
    %v162 = vpop.f32.mrf.mxu0
    %163 = vdwg.mxu0
    %v164 = vmax.f32 %v161, 0.0
    %v165 = vpack.c.bf16 %v164, %v164
    %v166 = vld [vmem:[#allocation5] sm:$0xf]
    %v167 = vld [vmem:[#allocation5 + $0x4] sm:$0xf]
    %v168 = vld [vmem:[#allocation5 + $0x8] sm:$0xf]
    %v169 = vld [vmem:[#allocation5 + $0xc] sm:$0xf]
    %v170 = vld [vmem:[#allocation5 + $0x10] sm:$0xf]
    %v171 = vld [vmem:[#allocation5 + $0x14] sm:$0xf]
    %v172 = vld [vmem:[#allocation5 + $0x18] sm:$0xf]
    %v173 = vld [vmem:[#allocation5 + $0x1c] sm:$0xf]
    %v174 = vld [vmem:[#allocation5 + $0x20] sm:$0xf]
    %v175 = vld [vmem:[#allocation5 + $0x24] sm:$0xf]
    %v176 = vld [vmem:[#allocation5 + $0x28] sm:$0xf]
    %v177 = vld [vmem:[#allocation5 + $0x2c] sm:$0xf]
    %v178 = vld [vmem:[#allocation5 + $0x30] sm:$0xf]
    %v179 = vld [vmem:[#allocation5 + $0x34] sm:$0xf]
    %v180 = vld [vmem:[#allocation5 + $0x38] sm:$0xf]
    %v181 = vld [vmem:[#allocation5 + $0x3c] sm:$0xf]
    %v182 = vld [vmem:[%s6] sm:$0x1]
    %v184 = vperm.slane %v182, 0
    %v202 = vunpack.c.l.b16 %v166
    %v203 = vunpack.c.l.b16 %v167
    %v204 = vunpack.c.l.b16 %v168
    %v205 = vunpack.c.l.b16 %v169
    %v206 = vunpack.c.l.b16 %v170
    %v207 = vunpack.c.l.b16 %v171
    %v208 = vunpack.c.l.b16 %v172
    %v209 = vunpack.c.l.b16 %v173
    %v210 = vunpack.c.l.b16 %v174
    %v211 = vunpack.c.l.b16 %v175
    %v212 = vunpack.c.l.b16 %v176
    %v213 = vunpack.c.l.b16 %v177
    %v214 = vunpack.c.l.b16 %v178
    %v215 = vunpack.c.l.b16 %v179
    %v216 = vunpack.c.l.b16 %v180
    %v217 = vunpack.c.l.b16 %v181
    %v218 = vpack.c.b16 %v203, %v202
    %v219 = vpack.c.b16 %v205, %v204
    %v220 = vpack.c.b16 %v207, %v206
    %v221 = vpack.c.b16 %v209, %v208
    %v222 = vpack.c.b16 %v211, %v210
    %v223 = vpack.c.b16 %v213, %v212
    %v224 = vpack.c.b16 %v215, %v214
    %v225 = vpack.c.b16 %v217, %v216
    %234 = vmatpush.bf16.msra.mxu0 %v225
    %235 = vmatpush.bf16.msra.mxu0 %v224
    %236 = vmatpush.bf16.msra.mxu0 %v223
    %237 = vmatpush.bf16.msra.mxu0 %v222
    %238 = vmatpush.bf16.msra.mxu0 %v221
    %239 = vmatpush.bf16.msra.mxu0 %v220
    %240 = vmatpush.bf16.msra.mxu0 %v219
    %241 = vmatpush.bf16.msra.mxu0 %v218
    %242 = vmatmul.bf16.gmra.mxu0 %v165
    %v243 = vpop.f32.mrf.mxu0
    %v244 = vadd.f32 %v184, %v243
    %v245 = vpop.f32.mrf.mxu0
    %246 = vdwg.mxu0
    %247 = vst [vmem:[#allocation7] sm:$0xff] %v244
    // Predicated region
    $region38: #{tpu_custom_call.1} parent=1 // pred_check
      _
    $region39: #{tpu_custom_call.1} parent=1 // pred_check_branch
      %249 = sbr.rel (0) target = $region41
    $region40: #{tpu_custom_call.1} parent=1 // pred_region
      %251 = vsyncadd [#allocation4], 0
      %s253 = sshll.u32 [#allocation7], 4
      %s254 = int_to_ptr.vmem [resolvable:$true] %s253
      %s255 = sshll.u32 %s7, 4
      %s256 = int_to_ptr.hbm [resolvable:$true] %s255
      %258 = dma.vmem_to_hbm [thread:$0]  %s254, 128, %s256, [#allocation4]
    $region41: #{tpu_custom_call.1} parent=1 // pred_fallthru
      _
    // Predicated region
    $region42: #{tpu_custom_call.1} parent=1 // pred_check
      _
    $region43: #{tpu_custom_call.1} parent=1 // pred_check_branch
      %260 = sbr.rel (0) target = $region45
    $region44: #{tpu_custom_call.1} parent=1 // pred_region
      %262 = dma.done [#allocation4], 128
    $region45: #{tpu_custom_call.1} parent=1 // pred_fallthru
      _
    %263 = vsyncpa [#allocation3], 1
    %264 = vsyncpa [#allocation6], 1
    %265 = vsyncpa [#allocation4], 1

</llo_original>
